<compile_context>
chip_gen: v6e
topology: v6e:2x2x1
jax: 0.10.0
libtpu: 0.0.40
codegen_flags: <defaults>
</compile_context>

<pallas_src>
import jax
import jax.numpy as jnp
from jax.experimental import pallas as pl
from jax.experimental.pallas import tpu as pltpu


def _round_up(x, m):
    return ((x + m - 1) // m) * m


def _value_mlp_kernel(x_ref, w1_ref, b1_ref, w2_ref, b2_ref, w3_ref, b3_ref, o_ref):
    # Layer 1 (MXU): (TB, S) @ (S, 256) -> f32 (TB, 256); epilogue in f32.
    h1 = jnp.dot(x_ref[...], w1_ref[...], preferred_element_type=jnp.float32)
    h1 = jnp.maximum(h1 + b1_ref[...], 0.0)

    # Layer 2 (MXU, A @ B^T form): (64, 256) contracted with (TB, 256) along
    # the 256-dim -> (64, TB).  Batch now sits on the lane axis, which makes
    # the final output lane-dense.  Re-cast the activations to the MXU dtype.
    h2t = jax.lax.dot_general(
        w2_ref[...], h1.astype(w2_ref.dtype),
        dimension_numbers=(((1,), (1,)), ((), ())),
        preferred_element_type=jnp.float32)
    h2t = jnp.maximum(h2t + b2_ref[...], 0.0)            # b2 is (64, 1)

    # Layer 3 (VPU mul + XLU sublane reduce, no N=1 MXU matmul):
    # sum_k h2t[k, b] * w3[k] -> (1, TB) lane-dense row.
    out_row = jnp.sum(h2t * w3_ref[...], axis=0, keepdims=True) + b3_ref[...]
    o_ref[...] = out_row.astype(o_ref.dtype)


def value_model_forward(states, params, *, tb=512, compute_dtype=jnp.bfloat16):
    """states: (B, state_dim) f32.  Returns (B, 1) f32 (matches PyTorch module)."""
    B, state_dim = states.shape
    tb = min(tb, _round_up(max(B, 1), 128))   # multiple of 128, capped for VMEM
    n_tiles = pl.cdiv(B, tb)

    # MXU operands in bf16 (f32 accumulation); biases / final weight stay f32.
    x = states.astype(compute_dtype)
    w1 = params["w1"].astype(compute_dtype)
    w2 = params["w2"].astype(compute_dtype)
    b1, b2 = params["b1"], params["b2"]
    w3, b3 = params["w3"], params["b3"]

    flops = 2 * B * (state_dim * 256 + 256 * 64 + 64)
    bytes_accessed = (
        B * state_dim * x.dtype.itemsize                        # states stream
        + w1.size * w1.dtype.itemsize + w2.size * w2.dtype.itemsize
        + (b1.size + b2.size + w3.size + b3.size) * 4
        + B * 4)                                                # output

    out = pl.pallas_call(
        _value_mlp_kernel,
        out_shape=jax.ShapeDtypeStruct((1, B), jnp.float32),
        grid=(n_tiles,),
        in_specs=[
            pl.BlockSpec((tb, state_dim), lambda i: (i, 0)),    # states (streamed)
            pl.BlockSpec(w1.shape, lambda i: (0, 0)),           # w1 (S, 256) resident
            pl.BlockSpec(b1.shape, lambda i: (0, 0)),           # b1 (1, 256)
            pl.BlockSpec(w2.shape, lambda i: (0, 0)),           # w2 (64, 256)
            pl.BlockSpec(b2.shape, lambda i: (0, 0)),           # b2 (64, 1)
            pl.BlockSpec(w3.shape, lambda i: (0, 0)),           # w3 (64, 1)
            pl.BlockSpec(b3.shape, lambda i: (0, 0)),           # b3 (1, 1)
        ],
        out_specs=pl.BlockSpec((1, tb), lambda i: (0, i)),      # lane-dense rows
        compiler_params=pltpu.CompilerParams(
            dimension_semantics=("parallel",)),
        cost_estimate=pl.CostEstimate(
            flops=flops, transcendentals=0, bytes_accessed=bytes_accessed),
    )(x, w1, b1, w2, b2, w3, b3)

    return out.reshape(B, 1)


def init_params(key, state_dim):
    """Weight layouts chosen for the kernel:
         w1: (state_dim, 256)  used as x @ w1            b1: (1, 256)
         w2: (64, 256)         PyTorch (out, in); used as w2 @ h1^T   b2: (64, 1)
         w3: (64, 1)           final layer as VPU reduce             b3: (1, 1)
       Values follow PyTorch nn.Linear default U(-1/sqrt(fan_in), 1/sqrt(fan_in)).
    """
    specs = [
        ("w1", (state_dim, 256), state_dim), ("b1", (1, 256), state_dim),
        ("w2", (64, 256), 256),              ("b2", (64, 1), 256),
        ("w3", (64, 1), 64),                 ("b3", (1, 1), 64),
    ]
    params = {}
    for name, shape, fan_in in specs:
        key, k = jax.random.split(key)
        bound = 1.0 / (fan_in ** 0.5)
        params[name] = jax.random.uniform(
            k, shape, jnp.float32, minval=-bound, maxval=bound)
    return params


def _reference_forward(states, p, compute_dtype=jnp.bfloat16):
    """Pure-JAX reference mirroring the kernel's precision choices."""
    x = states.astype(compute_dtype)
    w1 = p["w1"].astype(compute_dtype)
    w2 = p["w2"].astype(compute_dtype)
    h1 = jnp.maximum(
        jnp.dot(x, w1, preferred_element_type=jnp.float32) + p["b1"], 0.0)
    h1 = h1.astype(compute_dtype)
    h2 = jnp.maximum(
        jnp.dot(h1, w2.T, preferred_element_type=jnp.float32) + p["b2"].T, 0.0)
    return jnp.dot(h2, p["w3"], preferred_element_type=jnp.float32) + p["b3"]


if __name__ == "__main__":
    key = jax.random.PRNGKey(0)
    batch, state_dim = 2, 32

    key, k_states = jax.random.split(key)
    states = jax.random.normal(k_states, (batch, state_dim), jnp.float32)
    params = init_params(key, state_dim)

    out = jax.block_until_ready(value_model_forward(states, params))
    ref = _reference_forward(states, params)

    assert out.shape == (batch, 1), out.shape
    assert jnp.allclose(out, ref, atol=1e-4, rtol=1e-4), (out, ref)

    print("KERNEL_OK")
</pallas_src>

<mosaic_0001>
module attributes {stable_mosaic.version = 11 : i64} {
  func.func @_value_mlp_kernel(%arg0: i32, %arg1: memref<128x32xbf16, #tpu.memory_space<vmem>>, %arg2: memref<32x256xbf16, #tpu.memory_space<vmem>>, %arg3: memref<1x256xf32, #tpu.memory_space<vmem>>, %arg4: memref<64x256xbf16, #tpu.memory_space<vmem>>, %arg5: memref<64x1xf32, #tpu.memory_space<vmem>>, %arg6: memref<64x1xf32, #tpu.memory_space<vmem>>, %arg7: memref<1x1xf32, #tpu.memory_space<vmem>>, %arg8: memref<1x128xf32, #tpu.memory_space<vmem>>) attributes {dimension_semantics = [#tpu.dimension_semantics<parallel>], iteration_bounds = array<i64: 1>, scalar_prefetch = 0 : i64, scratch_operands = 0 : i64, tpu.core_type = #tpu.core_type<tc>, window_params = [{transform_indices = @transform_0, window_bounds = array<i64: 128, 32>}, {pipeline_mode = #tpu.pipeline_mode<synchronous>, transform_indices = @transform_1, window_bounds = array<i64: 32, 256>}, {pipeline_mode = #tpu.pipeline_mode<synchronous>, transform_indices = @transform_2, window_bounds = array<i64: 1, 256>}, {pipeline_mode = #tpu.pipeline_mode<synchronous>, transform_indices = @transform_3, window_bounds = array<i64: 64, 256>}, {pipeline_mode = #tpu.pipeline_mode<synchronous>, transform_indices = @transform_4, window_bounds = array<i64: 64, 1>}, {pipeline_mode = #tpu.pipeline_mode<synchronous>, transform_indices = @transform_5, window_bounds = array<i64: 64, 1>}, {pipeline_mode = #tpu.pipeline_mode<synchronous>, transform_indices = @transform_6, window_bounds = array<i64: 1, 1>}, {transform_indices = @transform_7, window_bounds = array<i64: 1, 128>}]} {
    %c0 = arith.constant 0 : index
    %c0_0 = arith.constant 0 : index
    %0 = vector.load %arg1[%c0, %c0_0] : memref<128x32xbf16, #tpu.memory_space<vmem>>, vector<128x32xbf16>
    %c0_1 = arith.constant 0 : index
    %c0_2 = arith.constant 0 : index
    %1 = vector.load %arg2[%c0_1, %c0_2] : memref<32x256xbf16, #tpu.memory_space<vmem>>, vector<32x256xbf16>
    %cst = arith.constant dense<0.000000e+00> : vector<128x256xf32>
    %2 = tpu.matmul %0, %1, %cst {dimension_numbers = #tpu.dot_dimension_numbers<[1], [0], [0], [1], [0, 0, 1, 1], [], []>} : vector<128x32xbf16>, vector<32x256xbf16>, vector<128x256xf32> -> vector<128x256xf32>
    %c0_3 = arith.constant 0 : index
    %c0_4 = arith.constant 0 : index
    %3 = vector.load %arg3[%c0_3, %c0_4] : memref<1x256xf32, #tpu.memory_space<vmem>>, vector<1x256xf32>
    %4 = vector.broadcast %3 : vector<1x256xf32> to vector<128x256xf32>
    %5 = arith.addf %2, %4 : vector<128x256xf32>
    %cst_5 = arith.constant 0.000000e+00 : f32
    %6 = vector.broadcast %cst_5 : f32 to vector<128x256xf32>
    %7 = arith.maximumf %5, %6 : vector<128x256xf32>
    %c0_6 = arith.constant 0 : index
    %c0_7 = arith.constant 0 : index
    %8 = vector.load %arg4[%c0_6, %c0_7] : memref<64x256xbf16, #tpu.memory_space<vmem>>, vector<64x256xbf16>
    %9 = arith.truncf %7 : vector<128x256xf32> to vector<128x256xbf16>
    %cst_8 = arith.constant dense<0.000000e+00> : vector<64x128xf32>
    %10 = tpu.matmul %8, %9, %cst_8 {dimension_numbers = #tpu.dot_dimension_numbers<[1], [1], [0], [0], [0, 0, 1, 0], [], []>} : vector<64x256xbf16>, vector<128x256xbf16>, vector<64x128xf32> -> vector<64x128xf32>
    %c0_9 = arith.constant 0 : index
    %c0_10 = arith.constant 0 : index
    %11 = vector.load %arg5[%c0_9, %c0_10] : memref<64x1xf32, #tpu.memory_space<vmem>>, vector<64x1xf32>
    %12 = vector.broadcast %11 : vector<64x1xf32> to vector<64x128xf32>
    %13 = arith.addf %10, %12 : vector<64x128xf32>
    %cst_11 = arith.constant 0.000000e+00 : f32
    %14 = vector.broadcast %cst_11 : f32 to vector<64x128xf32>
    %15 = arith.maximumf %13, %14 : vector<64x128xf32>
    %c0_12 = arith.constant 0 : index
    %c0_13 = arith.constant 0 : index
    %16 = vector.load %arg6[%c0_12, %c0_13] : memref<64x1xf32, #tpu.memory_space<vmem>>, vector<64x1xf32>
    %17 = vector.broadcast %16 : vector<64x1xf32> to vector<64x128xf32>
    %18 = arith.mulf %15, %17 : vector<64x128xf32>
    %cst_14 = arith.constant dense<0.000000e+00> : vector<128xf32>
    %19 = vector.multi_reduction <add>, %18, %cst_14 [0] : vector<64x128xf32> to vector<128xf32>
    %20 = vector.shape_cast %19 : vector<128xf32> to vector<1x128xf32>
    %c0_15 = arith.constant 0 : index
    %c0_16 = arith.constant 0 : index
    %21 = vector.load %arg7[%c0_15, %c0_16] : memref<1x1xf32, #tpu.memory_space<vmem>>, vector<1x1xf32>
    %22 = vector.broadcast %21 : vector<1x1xf32> to vector<1x128xf32>
    %23 = arith.addf %20, %22 : vector<1x128xf32>
    %c0_17 = arith.constant 0 : index
    %c0_18 = arith.constant 0 : index
    %24 = vector.load %arg8[%c0_17, %c0_18] : memref<1x128xf32, #tpu.memory_space<vmem>>, vector<1x128xf32>
    tpu.vector_store %arg8[%c0_17, %c0_18], %23 {strides = array<i32>} : memref<1x128xf32, #tpu.memory_space<vmem>>, vector<1x128xf32>,
    return
  }
  func.func @transform_0(%arg0: i32) -> (i32, i32) {
    %c0_i32 = arith.constant 0 : i32
    %c0_i32_0 = arith.constant 0 : i32
    return %arg0, %c0_i32 : i32, i32
  }
  func.func @transform_1(%arg0: i32) -> (i32, i32) {
    %c0_i32 = arith.constant 0 : i32
    %c0_i32_0 = arith.constant 0 : i32
    %c0_i32_1 = arith.constant 0 : i32
    return %c0_i32, %c0_i32_0 : i32, i32
  }
  func.func @transform_2(%arg0: i32) -> (i32, i32) {
    %c0_i32 = arith.constant 0 : i32
    %c0_i32_0 = arith.constant 0 : i32
    %c0_i32_1 = arith.constant 0 : i32
    return %c0_i32, %c0_i32_0 : i32, i32
  }
  func.func @transform_3(%arg0: i32) -> (i32, i32) {
    %c0_i32 = arith.constant 0 : i32
    %c0_i32_0 = arith.constant 0 : i32
    %c0_i32_1 = arith.constant 0 : i32
    return %c0_i32, %c0_i32_0 : i32, i32
  }
  func.func @transform_4(%arg0: i32) -> (i32, i32) {
    %c0_i32 = arith.constant 0 : i32
    %c0_i32_0 = arith.constant 0 : i32
    %c0_i32_1 = arith.constant 0 : i32
    return %c0_i32, %c0_i32_0 : i32, i32
  }
  func.func @transform_5(%arg0: i32) -> (i32, i32) {
    %c0_i32 = arith.constant 0 : i32
    %c0_i32_0 = arith.constant 0 : i32
    %c0_i32_1 = arith.constant 0 : i32
    return %c0_i32, %c0_i32_0 : i32, i32
  }
  func.func @transform_6(%arg0: i32) -> (i32, i32) {
    %c0_i32 = arith.constant 0 : i32
    %c0_i32_0 = arith.constant 0 : i32
    %c0_i32_1 = arith.constant 0 : i32
    return %c0_i32, %c0_i32_0 : i32, i32
  }
  func.func @transform_7(%arg0: i32) -> (i32, i32) {
    %c0_i32 = arith.constant 0 : i32
    %c0_i32_0 = arith.constant 0 : i32
    return %c0_i32, %arg0 : i32, i32
  }
}

</mosaic_0001>

<llo_original>
// kernel: tpu_custom_call.1
$region0: #{tpu_custom_call.1}
  #allocation0 [shape = 'u32[]', space=smem, size = 0x4, offset = 0x4, fixed_abs, tag = 'smem constant byte address 0x4 - core index']
  #allocation1 [shape = 'u32[144,128]{1,0:T(1,128)}', space=vmem, size = 0x12000, scoped, tag = 'internal scratch']
  #allocation2 [shape = 'f32[1,1]{1,0:T(1,128)S(1)}', space=vmem, size = 0x200, scoped, tag = 'scoped memory for tpu_custom_call.1']
  %s0 = inlined_call_operand.vmem [shape: bf16[2,32], index: 0, kind: input, shape index: {}]
  %s1 = inlined_call_operand.vmem [shape: bf16[32,256], index: 1, kind: input, shape index: {}]
  %s2 = inlined_call_operand.vmem [shape: f32[1,256], index: 2, kind: input, shape index: {}]
  %s3 = inlined_call_operand.vmem [shape: bf16[64,256], index: 3, kind: input, shape index: {}]
  %s4 = inlined_call_operand.vmem [shape: f32[64,1], index: 4, kind: input, shape index: {}]
  %s5 = inlined_call_operand.vmem [shape: f32[64,1], index: 5, kind: input, shape index: {}]
  %s6 = inlined_call_operand.<no memory space> [shape: f32[1,1], index: 6, kind: input, shape index: {}]
  %s7 = inlined_call_operand.hbm [shape: f32[1,2], index: 7, kind: output, shape index: {}]
  %s8 = sld [smem:[#allocation0]]
  $region38: #{tpu_custom_call.1} parent=0
    _
  %s10 = ssub.s32 1, %s8
  %s11 = scalar_select 0, %s10, %s8
  %v12 = vstv %s6
  %13 = vst [vmem:[#allocation2] sm:$0x1] %v12
  $region1: #{tpu_custom_call.1} parent=0
    #allocation3 [shape = 'u8[512]{0}', space=vmem, size = 0x400, scoped, tag = 'output window, operand 0, single buffered']
    #allocation4 [shape = 's32[1]{0}', space=sflag, size = 0x4, scoped, tag = 'scoped memory for tpu_custom_call.1']
    %14 = vsyncpa [#allocation4], 0
    // Predicated region
    $region2: #{tpu_custom_call.1} parent=1 // pred_check
      _
    $region3: #{tpu_custom_call.1} parent=1 // pred_check_branch
      %16 = sbr.rel (0) target = $region5
    $region4: #{tpu_custom_call.1} parent=1 // pred_region
      _
    $region5: #{tpu_custom_call.1} parent=1 // pred_fallthru
      _
    // Predicated region
    $region6: #{tpu_custom_call.1} parent=1 // pred_check
      _
    $region7: #{tpu_custom_call.1} parent=1 // pred_check_branch
      %18 = sbr.rel (0) target = $region9
    $region8: #{tpu_custom_call.1} parent=1 // pred_region
      _
    $region9: #{tpu_custom_call.1} parent=1 // pred_fallthru
      _
    // Predicated region
    $region10: #{tpu_custom_call.1} parent=1 // pred_check
      _
    $region11: #{tpu_custom_call.1} parent=1 // pred_check_branch
      %20 = sbr.rel (0) target = $region13
    $region12: #{tpu_custom_call.1} parent=1 // pred_region
      _
    $region13: #{tpu_custom_call.1} parent=1 // pred_fallthru
      _
    // Predicated region
    $region14: #{tpu_custom_call.1} parent=1 // pred_check
      _
    $region15: #{tpu_custom_call.1} parent=1 // pred_check_branch
      %22 = sbr.rel (0) target = $region17
    $region16: #{tpu_custom_call.1} parent=1 // pred_region
      _
    $region17: #{tpu_custom_call.1} parent=1 // pred_fallthru
      _
    // Predicated region
    $region18: #{tpu_custom_call.1} parent=1 // pred_check
      _
    $region19: #{tpu_custom_call.1} parent=1 // pred_check_branch
      %24 = sbr.rel (0) target = $region21
    $region20: #{tpu_custom_call.1} parent=1 // pred_region
      _
    $region21: #{tpu_custom_call.1} parent=1 // pred_fallthru
      _
    // Predicated region
    $region22: #{tpu_custom_call.1} parent=1 // pred_check
      _
    $region23: #{tpu_custom_call.1} parent=1 // pred_check_branch
      %26 = sbr.rel (0) target = $region25
    $region24: #{tpu_custom_call.1} parent=1 // pred_region
      _
    $region25: #{tpu_custom_call.1} parent=1 // pred_fallthru
      _
    // Predicated region
    $region26: #{tpu_custom_call.1} parent=1 // pred_check
      _
    $region27: #{tpu_custom_call.1} parent=1 // pred_check_branch
      %28 = sbr.rel (0) target = $region29
    $region28: #{tpu_custom_call.1} parent=1 // pred_region
      _
    $region29: #{tpu_custom_call.1} parent=1 // pred_fallthru
      _
    %v30 = vld [vmem:[%s0] sm:$0x1]
    %v31 = vld [vmem:[%s0 + $0x1] sm:$0x1]
    %v32 = vld [vmem:[%s0 + $0x2] sm:$0x1]
    %v33 = vld [vmem:[%s0 + $0x3] sm:$0x1]
    %v34 = vld [vmem:[%s0 + $0x4] sm:$0x1]
    %v35 = vld [vmem:[%s0 + $0x5] sm:$0x1]
    %v36 = vld [vmem:[%s0 + $0x6] sm:$0x1]
    %v37 = vld [vmem:[%s0 + $0x7] sm:$0x1]
    %v38 = vld [vmem:[%s0 + $0x8] sm:$0x1]
    %v39 = vld [vmem:[%s0 + $0x9] sm:$0x1]
    %v40 = vld [vmem:[%s0 + $0xa] sm:$0x1]
    %v41 = vld [vmem:[%s0 + $0xb] sm:$0x1]
    %v42 = vld [vmem:[%s0 + $0xc] sm:$0x1]
    %v43 = vld [vmem:[%s0 + $0xd] sm:$0x1]
    %v44 = vld [vmem:[%s0 + $0xe] sm:$0x1]
    %v45 = vld [vmem:[%s0 + $0xf] sm:$0x1]
    %v46 = vld [vmem:[%s0 + $0x10] sm:$0x1]
    %v47 = vld [vmem:[%s0 + $0x11] sm:$0x1]
    %v48 = vld [vmem:[%s0 + $0x12] sm:$0x1]
    %v49 = vld [vmem:[%s0 + $0x13] sm:$0x1]
    %v50 = vld [vmem:[%s0 + $0x14] sm:$0x1]
    %v51 = vld [vmem:[%s0 + $0x15] sm:$0x1]
    %v52 = vld [vmem:[%s0 + $0x16] sm:$0x1]
    %v53 = vld [vmem:[%s0 + $0x17] sm:$0x1]
    %v54 = vld [vmem:[%s0 + $0x18] sm:$0x1]
    %v55 = vld [vmem:[%s0 + $0x19] sm:$0x1]
    %v56 = vld [vmem:[%s0 + $0x1a] sm:$0x1]
    %v57 = vld [vmem:[%s0 + $0x1b] sm:$0x1]
    %v58 = vld [vmem:[%s0 + $0x1c] sm:$0x1]
    %v59 = vld [vmem:[%s0 + $0x1d] sm:$0x1]
    %v60 = vld [vmem:[%s0 + $0x1e] sm:$0x1]
    %v61 = vld [vmem:[%s0 + $0x1f] sm:$0x1]
    %v62 = vld [vmem:[%s0 + $0x20] sm:$0x1]
    %v63 = vld [vmem:[%s0 + $0x21] sm:$0x1]
    %v64 = vld [vmem:[%s0 + $0x22] sm:$0x1]
    %v65 = vld [vmem:[%s0 + $0x23] sm:$0x1]
    %v66 = vld [vmem:[%s0 + $0x24] sm:$0x1]
    %v67 = vld [vmem:[%s0 + $0x25] sm:$0x1]
    %v68 = vld [vmem:[%s0 + $0x26] sm:$0x1]
    %v69 = vld [vmem:[%s0 + $0x27] sm:$0x1]
    %v70 = vld [vmem:[%s0 + $0x28] sm:$0x1]
    %v71 = vld [vmem:[%s0 + $0x29] sm:$0x1]
    %v72 = vld [vmem:[%s0 + $0x2a] sm:$0x1]
    %v73 = vld [vmem:[%s0 + $0x2b] sm:$0x1]
    %v74 = vld [vmem:[%s0 + $0x2c] sm:$0x1]
    %v75 = vld [vmem:[%s0 + $0x2d] sm:$0x1]
    %v76 = vld [vmem:[%s0 + $0x2e] sm:$0x1]
    %v77 = vld [vmem:[%s0 + $0x2f] sm:$0x1]
    %v78 = vld [vmem:[%s0 + $0x30] sm:$0x1]
    %v79 = vld [vmem:[%s0 + $0x31] sm:$0x1]
    %v80 = vld [vmem:[%s0 + $0x32] sm:$0x1]
    %v81 = vld [vmem:[%s0 + $0x33] sm:$0x1]
    %v82 = vld [vmem:[%s0 + $0x34] sm:$0x1]
    %v83 = vld [vmem:[%s0 + $0x35] sm:$0x1]
    %v84 = vld [vmem:[%s0 + $0x36] sm:$0x1]
    %v85 = vld [vmem:[%s0 + $0x37] sm:$0x1]
    %v86 = vld [vmem:[%s0 + $0x38] sm:$0x1]
    %v87 = vld [vmem:[%s0 + $0x39] sm:$0x1]
    %v88 = vld [vmem:[%s0 + $0x3a] sm:$0x1]
    %v89 = vld [vmem:[%s0 + $0x3b] sm:$0x1]
    %v90 = vld [vmem:[%s0 + $0x3c] sm:$0x1]
    %v91 = vld [vmem:[%s0 + $0x3d] sm:$0x1]
    %v92 = vld [vmem:[%s0 + $0x3e] sm:$0x1]
    %v93 = vld [vmem:[%s0 + $0x3f] sm:$0x1]
    %v94 = vld [vmem:[%s1] sm:$0xff]
    %v95 = vld [vmem:[%s1 + $0x8] sm:$0xff]
    %v96 = vld [vmem:[%s1 + $0x10] sm:$0xff]
    %v97 = vld [vmem:[%s1 + $0x18] sm:$0xff]
    %v98 = vld [vmem:[%s2] sm:$0x3]
    %v100 = vlaneseq
    %v101 = vshrl.u32 %v100, 7
    %v102 = vsub.s32 0, %v101
    %v103 = vrot.slane %v98, %v102
    %v104 = vlaneseq
    %v105 = vshrl.u32 %v104, 7
    %v106 = vsub.s32 1, %v105
    %v107 = vrot.slane %v98, %v106
    %v174 = vcombine.low %v30, %v31
    %v175 = vcombine.low %v32, %v33
    %v176 = vcombine.low %v34, %v35
    %v177 = vcombine.low %v36, %v37
    %v179 = vunpack.c.l.s4 1966171168
    %v180 = vunpack.c.0.s8 %v179
    %v181 = vlaneseq
    %v182 = vshrl.u32 %v181, 7
    %v183 = vsub.s32 %v180, %v182
    %v184 = vrot.slane %v174, %v183
    %v186 = vunpack.c.l.s4 1966171168
    %v187 = vunpack.c.0.s8 %v186
    %v188 = vlaneseq
    %v189 = vshrl.u32 %v188, 7
    %v190 = vsub.s32 %v187, %v189
    %v191 = vrot.slane %v175, %v190
    %v193 = vunpack.c.l.s4 1966171168
    %v194 = vunpack.c.0.s8 %v193
    %v195 = vlaneseq
    %v196 = vshrl.u32 %v195, 7
    %v197 = vsub.s32 %v194, %v196
    %v198 = vrot.slane %v176, %v197
    %v200 = vunpack.c.l.s4 1966171168
    %v201 = vunpack.c.0.s8 %v200
    %v202 = vlaneseq
    %v203 = vshrl.u32 %v202, 7
    %v204 = vsub.s32 %v201, %v203
    %v205 = vrot.slane %v177, %v204
    %v206 = vcombine.low %v184, %v191
    %v207 = vcombine.low %v198, %v205
    %v209 = vunpack.c.l.s4 1966171168
    %v210 = vunpack.c.0.s8 %v209
    %v211 = vlaneseq
    %v212 = vshrl.u32 %v211, 7
    %v213 = vsub.s32 %v210, %v212
    %v214 = vrot.slane %v206, %v213
    %v216 = vunpack.c.l.s4 1966171168
    %v217 = vunpack.c.0.s8 %v216
    %v218 = vlaneseq
    %v219 = vshrl.u32 %v218, 7
    %v220 = vsub.s32 %v217, %v219
    %v221 = vrot.slane %v207, %v220
    %v222 = vcombine.low %v214, %v221
    %v223 = vcombine.low %v38, %v39
    %v224 = vcombine.low %v40, %v41
    %v225 = vcombine.low %v42, %v43
    %v226 = vcombine.low %v44, %v45
    %v228 = vunpack.c.l.s4 1966171168
    %v229 = vunpack.c.0.s8 %v228
    %v230 = vlaneseq
    %v231 = vshrl.u32 %v230, 7
    %v232 = vsub.s32 %v229, %v231
    %v233 = vrot.slane %v223, %v232
    %v235 = vunpack.c.l.s4 1966171168
    %v236 = vunpack.c.0.s8 %v235
    %v237 = vlaneseq
    %v238 = vshrl.u32 %v237, 7
    %v239 = vsub.s32 %v236, %v238
    %v240 = vrot.slane %v224, %v239
    %v242 = vunpack.c.l.s4 1966171168
    %v243 = vunpack.c.0.s8 %v242
    %v244 = vlaneseq
    %v245 = vshrl.u32 %v244, 7
    %v246 = vsub.s32 %v243, %v245
    %v247 = vrot.slane %v225, %v246
    %v249 = vunpack.c.l.s4 1966171168
    %v250 = vunpack.c.0.s8 %v249
    %v251 = vlaneseq
    %v252 = vshrl.u32 %v251, 7
    %v253 = vsub.s32 %v250, %v252
    %v254 = vrot.slane %v226, %v253
    %v255 = vcombine.low %v233, %v240
    %v256 = vcombine.low %v247, %v254
    %v258 = vunpack.c.l.s4 1966171168
    %v259 = vunpack.c.0.s8 %v258
    %v260 = vlaneseq
    %v261 = vshrl.u32 %v260, 7
    %v262 = vsub.s32 %v259, %v261
    %v263 = vrot.slane %v255, %v262
    %v265 = vunpack.c.l.s4 1966171168
    %v266 = vunpack.c.0.s8 %v265
    %v267 = vlaneseq
    %v268 = vshrl.u32 %v267, 7
    %v269 = vsub.s32 %v266, %v268
    %v270 = vrot.slane %v256, %v269
    %v271 = vcombine.low %v263, %v270
    %v272 = vcombine.low %v46, %v47
    %v273 = vcombine.low %v48, %v49
    %v274 = vcombine.low %v50, %v51
    %v275 = vcombine.low %v52, %v53
    %v277 = vunpack.c.l.s4 1966171168
    %v278 = vunpack.c.0.s8 %v277
    %v279 = vlaneseq
    %v280 = vshrl.u32 %v279, 7
    %v281 = vsub.s32 %v278, %v280
    %v282 = vrot.slane %v272, %v281
    %v284 = vunpack.c.l.s4 1966171168
    %v285 = vunpack.c.0.s8 %v284
    %v286 = vlaneseq
    %v287 = vshrl.u32 %v286, 7
    %v288 = vsub.s32 %v285, %v287
    %v289 = vrot.slane %v273, %v288
    %v291 = vunpack.c.l.s4 1966171168
    %v292 = vunpack.c.0.s8 %v291
    %v293 = vlaneseq
    %v294 = vshrl.u32 %v293, 7
    %v295 = vsub.s32 %v292, %v294
    %v296 = vrot.slane %v274, %v295
    %v298 = vunpack.c.l.s4 1966171168
    %v299 = vunpack.c.0.s8 %v298
    %v300 = vlaneseq
    %v301 = vshrl.u32 %v300, 7
    %v302 = vsub.s32 %v299, %v301
    %v303 = vrot.slane %v275, %v302
    %v304 = vcombine.low %v282, %v289
    %v305 = vcombine.low %v296, %v303
    %v307 = vunpack.c.l.s4 1966171168
    %v308 = vunpack.c.0.s8 %v307
    %v309 = vlaneseq
    %v310 = vshrl.u32 %v309, 7
    %v311 = vsub.s32 %v308, %v310
    %v312 = vrot.slane %v304, %v311
    %v314 = vunpack.c.l.s4 1966171168
    %v315 = vunpack.c.0.s8 %v314
    %v316 = vlaneseq
    %v317 = vshrl.u32 %v316, 7
    %v318 = vsub.s32 %v315, %v317
    %v319 = vrot.slane %v305, %v318
    %v320 = vcombine.low %v312, %v319
    %v321 = vcombine.low %v54, %v55
    %v322 = vcombine.low %v56, %v57
    %v323 = vcombine.low %v58, %v59
    %v324 = vcombine.low %v60, %v61
    %v326 = vunpack.c.l.s4 1966171168
    %v327 = vunpack.c.0.s8 %v326
    %v328 = vlaneseq
    %v329 = vshrl.u32 %v328, 7
    %v330 = vsub.s32 %v327, %v329
    %v331 = vrot.slane %v321, %v330
    %v333 = vunpack.c.l.s4 1966171168
    %v334 = vunpack.c.0.s8 %v333
    %v335 = vlaneseq
    %v336 = vshrl.u32 %v335, 7
    %v337 = vsub.s32 %v334, %v336
    %v338 = vrot.slane %v322, %v337
    %v340 = vunpack.c.l.s4 1966171168
    %v341 = vunpack.c.0.s8 %v340
    %v342 = vlaneseq
    %v343 = vshrl.u32 %v342, 7
    %v344 = vsub.s32 %v341, %v343
    %v345 = vrot.slane %v323, %v344
    %v347 = vunpack.c.l.s4 1966171168
    %v348 = vunpack.c.0.s8 %v347
    %v349 = vlaneseq
    %v350 = vshrl.u32 %v349, 7
    %v351 = vsub.s32 %v348, %v350
    %v352 = vrot.slane %v324, %v351
    %v353 = vcombine.low %v331, %v338
    %v354 = vcombine.low %v345, %v352
    %v356 = vunpack.c.l.s4 1966171168
    %v357 = vunpack.c.0.s8 %v356
    %v358 = vlaneseq
    %v359 = vshrl.u32 %v358, 7
    %v360 = vsub.s32 %v357, %v359
    %v361 = vrot.slane %v353, %v360
    %v363 = vunpack.c.l.s4 1966171168
    %v364 = vunpack.c.0.s8 %v363
    %v365 = vlaneseq
    %v366 = vshrl.u32 %v365, 7
    %v367 = vsub.s32 %v364, %v366
    %v368 = vrot.slane %v354, %v367
    %v369 = vcombine.low %v361, %v368
    %v370 = vcombine.low %v62, %v63
    %v371 = vcombine.low %v64, %v65
    %v372 = vcombine.low %v66, %v67
    %v373 = vcombine.low %v68, %v69
    %v375 = vunpack.c.l.s4 1966171168
    %v376 = vunpack.c.0.s8 %v375
    %v377 = vlaneseq
    %v378 = vshrl.u32 %v377, 7
    %v379 = vsub.s32 %v376, %v378
    %v380 = vrot.slane %v370, %v379
    %v382 = vunpack.c.l.s4 1966171168
    %v383 = vunpack.c.0.s8 %v382
    %v384 = vlaneseq
    %v385 = vshrl.u32 %v384, 7
    %v386 = vsub.s32 %v383, %v385
    %v387 = vrot.slane %v371, %v386
    %v389 = vunpack.c.l.s4 1966171168
    %v390 = vunpack.c.0.s8 %v389
    %v391 = vlaneseq
    %v392 = vshrl.u32 %v391, 7
    %v393 = vsub.s32 %v390, %v392
    %v394 = vrot.slane %v372, %v393
    %v396 = vunpack.c.l.s4 1966171168
    %v397 = vunpack.c.0.s8 %v396
    %v398 = vlaneseq
    %v399 = vshrl.u32 %v398, 7
    %v400 = vsub.s32 %v397, %v399
    %v401 = vrot.slane %v373, %v400
    %v402 = vcombine.low %v380, %v387
    %v403 = vcombine.low %v394, %v401
    %v405 = vunpack.c.l.s4 1966171168
    %v406 = vunpack.c.0.s8 %v405
    %v407 = vlaneseq
    %v408 = vshrl.u32 %v407, 7
    %v409 = vsub.s32 %v406, %v408
    %v410 = vrot.slane %v402, %v409
    %v412 = vunpack.c.l.s4 1966171168
    %v413 = vunpack.c.0.s8 %v412
    %v414 = vlaneseq
    %v415 = vshrl.u32 %v414, 7
    %v416 = vsub.s32 %v413, %v415
    %v417 = vrot.slane %v403, %v416
    %v418 = vcombine.low %v410, %v417
    %v419 = vcombine.low %v70, %v71
    %v420 = vcombine.low %v72, %v73
    %v421 = vcombine.low %v74, %v75
    %v422 = vcombine.low %v76, %v77
    %v424 = vunpack.c.l.s4 1966171168
    %v425 = vunpack.c.0.s8 %v424
    %v426 = vlaneseq
    %v427 = vshrl.u32 %v426, 7
    %v428 = vsub.s32 %v425, %v427
    %v429 = vrot.slane %v419, %v428
    %v431 = vunpack.c.l.s4 1966171168
    %v432 = vunpack.c.0.s8 %v431
    %v433 = vlaneseq
    %v434 = vshrl.u32 %v433, 7
    %v435 = vsub.s32 %v432, %v434
    %v436 = vrot.slane %v420, %v435
    %v438 = vunpack.c.l.s4 1966171168
    %v439 = vunpack.c.0.s8 %v438
    %v440 = vlaneseq
    %v441 = vshrl.u32 %v440, 7
    %v442 = vsub.s32 %v439, %v441
    %v443 = vrot.slane %v421, %v442
    %v445 = vunpack.c.l.s4 1966171168
    %v446 = vunpack.c.0.s8 %v445
    %v447 = vlaneseq
    %v448 = vshrl.u32 %v447, 7
    %v449 = vsub.s32 %v446, %v448
    %v450 = vrot.slane %v422, %v449
    %v451 = vcombine.low %v429, %v436
    %v452 = vcombine.low %v443, %v450
    %v454 = vunpack.c.l.s4 1966171168
    %v455 = vunpack.c.0.s8 %v454
    %v456 = vlaneseq
    %v457 = vshrl.u32 %v456, 7
    %v458 = vsub.s32 %v455, %v457
    %v459 = vrot.slane %v451, %v458
    %v461 = vunpack.c.l.s4 1966171168
    %v462 = vunpack.c.0.s8 %v461
    %v463 = vlaneseq
    %v464 = vshrl.u32 %v463, 7
    %v465 = vsub.s32 %v462, %v464
    %v466 = vrot.slane %v452, %v465
    %v467 = vcombine.low %v459, %v466
    %v468 = vcombine.low %v78, %v79
    %v469 = vcombine.low %v80, %v81
    %v470 = vcombine.low %v82, %v83
    %v471 = vcombine.low %v84, %v85
    %v473 = vunpack.c.l.s4 1966171168
    %v474 = vunpack.c.0.s8 %v473
    %v475 = vlaneseq
    %v476 = vshrl.u32 %v475, 7
    %v477 = vsub.s32 %v474, %v476
    %v478 = vrot.slane %v468, %v477
    %v480 = vunpack.c.l.s4 1966171168
    %v481 = vunpack.c.0.s8 %v480
    %v482 = vlaneseq
    %v483 = vshrl.u32 %v482, 7
    %v484 = vsub.s32 %v481, %v483
    %v485 = vrot.slane %v469, %v484
    %v487 = vunpack.c.l.s4 1966171168
    %v488 = vunpack.c.0.s8 %v487
    %v489 = vlaneseq
    %v490 = vshrl.u32 %v489, 7
    %v491 = vsub.s32 %v488, %v490
    %v492 = vrot.slane %v470, %v491
    %v494 = vunpack.c.l.s4 1966171168
    %v495 = vunpack.c.0.s8 %v494
    %v496 = vlaneseq
    %v497 = vshrl.u32 %v496, 7
    %v498 = vsub.s32 %v495, %v497
    %v499 = vrot.slane %v471, %v498
    %v500 = vcombine.low %v478, %v485
    %v501 = vcombine.low %v492, %v499
    %v503 = vunpack.c.l.s4 1966171168
    %v504 = vunpack.c.0.s8 %v503
    %v505 = vlaneseq
    %v506 = vshrl.u32 %v505, 7
    %v507 = vsub.s32 %v504, %v506
    %v508 = vrot.slane %v500, %v507
    %v510 = vunpack.c.l.s4 1966171168
    %v511 = vunpack.c.0.s8 %v510
    %v512 = vlaneseq
    %v513 = vshrl.u32 %v512, 7
    %v514 = vsub.s32 %v511, %v513
    %v515 = vrot.slane %v501, %v514
    %v516 = vcombine.low %v508, %v515
    %v517 = vcombine.low %v86, %v87
    %v518 = vcombine.low %v88, %v89
    %v519 = vcombine.low %v90, %v91
    %v520 = vcombine.low %v92, %v93
    %v522 = vunpack.c.l.s4 1966171168
    %v523 = vunpack.c.0.s8 %v522
    %v524 = vlaneseq
    %v525 = vshrl.u32 %v524, 7
    %v526 = vsub.s32 %v523, %v525
    %v527 = vrot.slane %v517, %v526
    %v529 = vunpack.c.l.s4 1966171168
    %v530 = vunpack.c.0.s8 %v529
    %v531 = vlaneseq
    %v532 = vshrl.u32 %v531, 7
    %v533 = vsub.s32 %v530, %v532
    %v534 = vrot.slane %v518, %v533
    %v536 = vunpack.c.l.s4 1966171168
    %v537 = vunpack.c.0.s8 %v536
    %v538 = vlaneseq
    %v539 = vshrl.u32 %v538, 7
    %v540 = vsub.s32 %v537, %v539
    %v541 = vrot.slane %v519, %v540
    %v543 = vunpack.c.l.s4 1966171168
    %v544 = vunpack.c.0.s8 %v543
    %v545 = vlaneseq
    %v546 = vshrl.u32 %v545, 7
    %v547 = vsub.s32 %v544, %v546
    %v548 = vrot.slane %v520, %v547
    %v549 = vcombine.low %v527, %v534
    %v550 = vcombine.low %v541, %v548
    %v552 = vunpack.c.l.s4 1966171168
    %v553 = vunpack.c.0.s8 %v552
    %v554 = vlaneseq
    %v555 = vshrl.u32 %v554, 7
    %v556 = vsub.s32 %v553, %v555
    %v557 = vrot.slane %v549, %v556
    %v559 = vunpack.c.l.s4 1966171168
    %v560 = vunpack.c.0.s8 %v559
    %v561 = vlaneseq
    %v562 = vshrl.u32 %v561, 7
    %v563 = vsub.s32 %v560, %v562
    %v564 = vrot.slane %v550, %v563
    %v565 = vcombine.low %v557, %v564
    %v570 = vunpack.c.l.b16 %v94
    %v571 = vunpack.c.h.b16 %v94
    %v572 = vunpack.c.l.b16 %v95
    %v573 = vunpack.c.h.b16 %v95
    %v574 = vunpack.c.l.b16 %v96
    %v575 = vunpack.c.h.b16 %v96
    %v576 = vunpack.c.l.b16 %v97
    %v577 = vunpack.c.h.b16 %v97
    %v578 = vpack.c.b16 %v572, %v570
    %v579 = vpack.c.b16 %v573, %v571
    %v580 = vpack.c.b16 %v576, %v574
    %v581 = vpack.c.b16 %v577, %v575
    %vm586 = vcmask 261120
    %v588 = vsel %vm586, %v222, 0
    %v591 = vsel %vm586, %v271, 0
    %v594 = vsel %vm586, %v320, 0
    %v597 = vsel %vm586, %v369, 0
    %v600 = vsel %vm586, %v418, 0
    %v603 = vsel %vm586, %v467, 0
    %v606 = vsel %vm586, %v516, 0
    %v609 = vsel %vm586, %v565, 0
    %611 = vmatprep.subr.bf16.mxu0 0
    %612 = vmatpush1.bf16.msra.mxu0 0
    %613 = vmatprep.subr.bf16.mxu0 0
    %614 = vmatpush1.bf16.msra.mxu0 0
    %615 = vmatprep.subr.bf16.mxu0 0
    %616 = vmatpush1.bf16.msra.mxu0 0
    %617 = vmatprep.subr.bf16.mxu0 0
    %618 = vmatpush1.bf16.msra.mxu0 0
    %619 = vmatprep.subr.bf16.mxu0 0
    %620 = vmatpush1.bf16.msra.mxu0 0
    %621 = vmatprep.subr.bf16.mxu0 0
    %622 = vmatpush1.bf16.msra.mxu0 0
    %623 = vmatprep.subr.bf16.mxu0 %v581
    %624 = vmatpush1.bf16.msra.mxu0 %v580
    %625 = vmatprep.subr.bf16.mxu0 %v579
    %626 = vmatpush1.bf16.msra.mxu0 %v578
    %627 = vmatprep.subr.bf16.mxu0 0
    %628 = vmatpush2.bf16.msra.mxu0 0
    %629 = vmatprep.subr.bf16.mxu0 0
    %630 = vmatpush2.bf16.msra.mxu0 0
    %631 = vmatprep.subr.bf16.mxu0 0
    %632 = vmatpush2.bf16.msra.mxu0 0
    %633 = vmatprep.subr.bf16.mxu0 0
    %634 = vmatpush2.bf16.msra.mxu0 0
    %635 = vmatprep.subr.bf16.mxu0 0
    %636 = vmatpush2.bf16.msra.mxu0 0
    %637 = vmatprep.subr.bf16.mxu0 0
    %638 = vmatpush2.bf16.msra.mxu0 0
    %639 = vmatprep.subr.bf16.mxu0 0
    %640 = vmatpush2.bf16.msra.mxu0 0
    %641 = vmatprep.subr.bf16.mxu0 0
    %642 = vmatpush2.bf16.msra.mxu0 0
    %643 = vmatprep.mubr.bf16.mxu0 0
    %644 = vmatmul.mubr.bf16.gmra.mxu0 %v588
    %v645 = vpop.f32.mrf.mxu0
    %v646 = vadd.f32 %v103, %v645
    %v647 = vpop.f32.mrf.mxu0
    %v648 = vadd.f32 %v107, %v647
    %v649 = vpop.f32.mrf.mxu0
    %v650 = vadd.f32 %v103, %v649
    %v651 = vpop.f32.mrf.mxu0
    %v652 = vadd.f32 %v107, %v651
    %653 = vmatprep.mubr.bf16.mxu0 0
    %654 = vmatmul.mubr.bf16.gmra.mxu0 %v591
    %v655 = vpop.f32.mrf.mxu0
    %v656 = vadd.f32 %v103, %v655
    %v657 = vpop.f32.mrf.mxu0
    %v658 = vadd.f32 %v107, %v657
    %v659 = vpop.f32.mrf.mxu0
    %v660 = vadd.f32 %v103, %v659
    %v661 = vpop.f32.mrf.mxu0
    %v662 = vadd.f32 %v107, %v661
    %663 = vmatprep.mubr.bf16.mxu0 0
    %664 = vmatmul.mubr.bf16.gmra.mxu0 %v594
    %v665 = vpop.f32.mrf.mxu0
    %v666 = vadd.f32 %v103, %v665
    %v667 = vpop.f32.mrf.mxu0
    %v668 = vadd.f32 %v107, %v667
    %v669 = vpop.f32.mrf.mxu0
    %v670 = vadd.f32 %v103, %v669
    %v671 = vpop.f32.mrf.mxu0
    %v672 = vadd.f32 %v107, %v671
    %673 = vmatprep.mubr.bf16.mxu0 0
    %674 = vmatmul.mubr.bf16.gmra.mxu0 %v597
    %v675 = vpop.f32.mrf.mxu0
    %v676 = vadd.f32 %v103, %v675
    %v677 = vpop.f32.mrf.mxu0
    %v678 = vadd.f32 %v107, %v677
    %v679 = vpop.f32.mrf.mxu0
    %v680 = vadd.f32 %v103, %v679
    %v681 = vpop.f32.mrf.mxu0
    %v682 = vadd.f32 %v107, %v681
    %683 = vmatprep.mubr.bf16.mxu0 0
    %684 = vmatmul.mubr.bf16.gmra.mxu0 %v600
    %v685 = vpop.f32.mrf.mxu0
    %v686 = vadd.f32 %v103, %v685
    %v687 = vpop.f32.mrf.mxu0
    %v688 = vadd.f32 %v107, %v687
    %v689 = vpop.f32.mrf.mxu0
    %v690 = vadd.f32 %v103, %v689
    %v691 = vpop.f32.mrf.mxu0
    %v692 = vadd.f32 %v107, %v691
    %693 = vmatprep.mubr.bf16.mxu0 0
    %694 = vmatmul.mubr.bf16.gmra.mxu0 %v603
    %v695 = vpop.f32.mrf.mxu0
    %v696 = vadd.f32 %v103, %v695
    %v697 = vpop.f32.mrf.mxu0
    %v698 = vadd.f32 %v107, %v697
    %v699 = vpop.f32.mrf.mxu0
    %v700 = vadd.f32 %v103, %v699
    %v701 = vpop.f32.mrf.mxu0
    %v702 = vadd.f32 %v107, %v701
    %703 = vmatprep.mubr.bf16.mxu0 0
    %704 = vmatmul.mubr.bf16.gmra.mxu0 %v606
    %v705 = vpop.f32.mrf.mxu0
    %v706 = vadd.f32 %v103, %v705
    %v707 = vpop.f32.mrf.mxu0
    %v708 = vadd.f32 %v107, %v707
    %v709 = vpop.f32.mrf.mxu0
    %v710 = vadd.f32 %v103, %v709
    %v711 = vpop.f32.mrf.mxu0
    %v712 = vadd.f32 %v107, %v711
    %713 = vmatprep.mubr.bf16.mxu0 0
    %714 = vmatmul.mubr.bf16.gmra.mxu0 %v609
    %v715 = vpop.f32.mrf.mxu0
    %v716 = vadd.f32 %v103, %v715
    %v717 = vpop.f32.mrf.mxu0
    %v718 = vadd.f32 %v107, %v717
    %v719 = vpop.f32.mrf.mxu0
    %v720 = vadd.f32 %v103, %v719
    %v721 = vpop.f32.mrf.mxu0
    %v722 = vadd.f32 %v107, %v721
    %723 = vdwg.mxu0
    %v724 = vmax.f32 %v646, 0.0
    %v725 = vmax.f32 %v648, 0.0
    %v726 = vmax.f32 %v650, 0.0
    %v727 = vmax.f32 %v652, 0.0
    %v728 = vmax.f32 %v656, 0.0
    %v729 = vmax.f32 %v658, 0.0
    %v730 = vmax.f32 %v660, 0.0
    %v731 = vmax.f32 %v662, 0.0
    %v732 = vmax.f32 %v666, 0.0
    %v733 = vmax.f32 %v668, 0.0
    %v734 = vmax.f32 %v670, 0.0
    %v735 = vmax.f32 %v672, 0.0
    %v736 = vmax.f32 %v676, 0.0
    %v737 = vmax.f32 %v678, 0.0
    %v738 = vmax.f32 %v680, 0.0
    %v739 = vmax.f32 %v682, 0.0
    %v740 = vmax.f32 %v686, 0.0
    %v741 = vmax.f32 %v688, 0.0
    %v742 = vmax.f32 %v690, 0.0
    %v743 = vmax.f32 %v692, 0.0
    %v744 = vmax.f32 %v696, 0.0
    %v745 = vmax.f32 %v698, 0.0
    %v746 = vmax.f32 %v700, 0.0
    %v747 = vmax.f32 %v702, 0.0
    %v748 = vmax.f32 %v706, 0.0
    %v749 = vmax.f32 %v708, 0.0
    %v750 = vmax.f32 %v710, 0.0
    %v751 = vmax.f32 %v712, 0.0
    %v752 = vmax.f32 %v716, 0.0
    %v753 = vmax.f32 %v718, 0.0
    %v754 = vmax.f32 %v720, 0.0
    %v755 = vmax.f32 %v722, 0.0
    %v756 = vld [vmem:[%s3] sm:$0xff]
    %v757 = vld [vmem:[%s3 + $0x8] sm:$0xff]
    %v758 = vld [vmem:[%s3 + $0x10] sm:$0xff]
    %v759 = vld [vmem:[%s3 + $0x18] sm:$0xff]
    %v760 = vld [vmem:[%s3 + $0x20] sm:$0xff]
    %v761 = vld [vmem:[%s3 + $0x28] sm:$0xff]
    %v762 = vld [vmem:[%s3 + $0x30] sm:$0xff]
    %v763 = vld [vmem:[%s3 + $0x38] sm:$0xff]
    %v764 = vpack.c.bf16 %v726, %v724
    %v765 = vpack.c.bf16 %v727, %v725
    %v766 = vpack.c.bf16 %v730, %v728
    %v767 = vpack.c.bf16 %v731, %v729
    %v768 = vpack.c.bf16 %v734, %v732
    %v769 = vpack.c.bf16 %v735, %v733
    %v770 = vpack.c.bf16 %v738, %v736
    %v771 = vpack.c.bf16 %v739, %v737
    %v772 = vpack.c.bf16 %v742, %v740
    %v773 = vpack.c.bf16 %v743, %v741
    %v774 = vpack.c.bf16 %v746, %v744
    %v775 = vpack.c.bf16 %v747, %v745
    %v776 = vpack.c.bf16 %v750, %v748
    %v777 = vpack.c.bf16 %v751, %v749
    %v778 = vpack.c.bf16 %v754, %v752
    %v779 = vpack.c.bf16 %v755, %v753
    %v780 = vld [vmem:[%s4] sm:$0xff]
    %v781 = vld [vmem:[%s4 + $0x8] sm:$0xff]
    %v782 = vld [vmem:[%s4 + $0x10] sm:$0xff]
    %v783 = vld [vmem:[%s4 + $0x18] sm:$0xff]
    %v784 = vld [vmem:[%s4 + $0x20] sm:$0xff]
    %v785 = vld [vmem:[%s4 + $0x28] sm:$0xff]
    %v786 = vld [vmem:[%s4 + $0x30] sm:$0xff]
    %v787 = vld [vmem:[%s4 + $0x38] sm:$0xff]
    %789 = vset.pattern.permute.xlu0 0
    %790 = vperm.xlu0 %789, %v780
    %v791 = vpop.permute.xlu0 %790
    %794 = vset.pattern.permute.xlu0 0
    %795 = vperm.xlu0 %794, %v781
    %v796 = vpop.permute.xlu0 %795
    %799 = vset.pattern.permute.xlu0 0
    %800 = vperm.xlu0 %799, %v782
    %v801 = vpop.permute.xlu0 %800
    %804 = vset.pattern.permute.xlu0 0
    %805 = vperm.xlu0 %804, %v783
    %v806 = vpop.permute.xlu0 %805
    %809 = vset.pattern.permute.xlu0 0
    %810 = vperm.xlu0 %809, %v784
    %v811 = vpop.permute.xlu0 %810
    %814 = vset.pattern.permute.xlu0 0
    %815 = vperm.xlu0 %814, %v785
    %v816 = vpop.permute.xlu0 %815
    %819 = vset.pattern.permute.xlu0 0
    %820 = vperm.xlu0 %819, %v786
    %v821 = vpop.permute.xlu0 %820
    %824 = vset.pattern.permute.xlu0 0
    %825 = vperm.xlu0 %824, %v787
    %v826 = vpop.permute.xlu0 %825
    %v836 = vunpack.c.l.b16 %v756
    %v837 = vunpack.c.h.b16 %v756
    %v838 = vunpack.c.l.b16 %v757
    %v839 = vunpack.c.h.b16 %v757
    %v840 = vunpack.c.l.b16 %v758
    %v841 = vunpack.c.h.b16 %v758
    %v842 = vunpack.c.l.b16 %v759
    %v843 = vunpack.c.h.b16 %v759
    %v844 = vunpack.c.l.b16 %v760
    %v845 = vunpack.c.h.b16 %v760
    %v846 = vunpack.c.l.b16 %v761
    %v847 = vunpack.c.h.b16 %v761
    %v848 = vunpack.c.l.b16 %v762
    %v849 = vunpack.c.h.b16 %v762
    %v850 = vunpack.c.l.b16 %v763
    %v851 = vunpack.c.h.b16 %v763
    %v852 = vpack.c.b16 %v838, %v836
    %v853 = vpack.c.b16 %v839, %v837
    %v854 = vpack.c.b16 %v842, %v840
    %v855 = vpack.c.b16 %v843, %v841
    %v856 = vpack.c.b16 %v846, %v844
    %v857 = vpack.c.b16 %v847, %v845
    %v858 = vpack.c.b16 %v850, %v848
    %v859 = vpack.c.b16 %v851, %v849
    %868 = vmatprep.subr.bf16.mxu0 %v779
    %869 = vmatpush1.bf16.xpose.msra.mxu0 %v778
    %870 = vmatprep.subr.bf16.mxu0 %v777
    %871 = vmatpush1.bf16.xpose.msra.mxu0 %v776
    %872 = vmatprep.subr.bf16.mxu0 %v775
    %873 = vmatpush1.bf16.xpose.msra.mxu0 %v774
    %874 = vmatprep.subr.bf16.mxu0 %v773
    %875 = vmatpush1.bf16.xpose.msra.mxu0 %v772
    %876 = vmatprep.subr.bf16.mxu0 %v771
    %877 = vmatpush1.bf16.xpose.msra.mxu0 %v770
    %878 = vmatprep.subr.bf16.mxu0 %v769
    %879 = vmatpush1.bf16.xpose.msra.mxu0 %v768
    %880 = vmatprep.subr.bf16.mxu0 %v767
    %881 = vmatpush1.bf16.xpose.msra.mxu0 %v766
    %882 = vmatprep.subr.bf16.mxu0 %v765
    %883 = vmatpush1.bf16.xpose.msra.mxu0 %v764
    %884 = vmatprep.subr.bf16.mxu0 0
    %885 = vmatpush2.bf16.xpose.msra.mxu0 0
    %886 = vmatprep.subr.bf16.mxu0 0
    %887 = vmatpush2.bf16.xpose.msra.mxu0 0
    %888 = vmatprep.subr.bf16.mxu0 0
    %889 = vmatpush2.bf16.xpose.msra.mxu0 0
    %890 = vmatprep.subr.bf16.mxu0 0
    %891 = vmatpush2.bf16.xpose.msra.mxu0 0
    %892 = vmatprep.subr.bf16.mxu0 0
    %893 = vmatpush2.bf16.xpose.msra.mxu0 0
    %894 = vmatprep.subr.bf16.mxu0 0
    %895 = vmatpush2.bf16.xpose.msra.mxu0 0
    %896 = vmatprep.subr.bf16.mxu0 0
    %897 = vmatpush2.bf16.xpose.msra.mxu0 0
    %898 = vmatprep.subr.bf16.mxu0 0
    %899 = vmatpush2.bf16.xpose.msra.mxu0 0
    %900 = vmatprep.mubr.bf16.mxu0 %v853
    %901 = vmatmul.mubr.bf16.gmra.mxu0 %v852
    %v902 = vpop.f32.mrf.mxu0
    %v903 = vadd.f32 %v791, %v902
    %v904 = vpop.f32.mrf.mxu0
    %v905 = vpop.f32.mrf.mxu0
    %v906 = vadd.f32 %v796, %v905
    %v907 = vpop.f32.mrf.mxu0
    %908 = vmatprep.mubr.bf16.mxu0 %v855
    %909 = vmatmul.mubr.bf16.gmra.mxu0 %v854
    %v910 = vpop.f32.mrf.mxu0
    %v911 = vadd.f32 %v801, %v910
    %v912 = vpop.f32.mrf.mxu0
    %v913 = vpop.f32.mrf.mxu0
    %v914 = vadd.f32 %v806, %v913
    %v915 = vpop.f32.mrf.mxu0
    %916 = vmatprep.mubr.bf16.mxu0 %v857
    %917 = vmatmul.mubr.bf16.gmra.mxu0 %v856
    %v918 = vpop.f32.mrf.mxu0
    %v919 = vadd.f32 %v811, %v918
    %v920 = vpop.f32.mrf.mxu0
    %v921 = vpop.f32.mrf.mxu0
    %v922 = vadd.f32 %v816, %v921
    %v923 = vpop.f32.mrf.mxu0
    %924 = vmatprep.mubr.bf16.mxu0 %v859
    %925 = vmatmul.mubr.bf16.gmra.mxu0 %v858
    %v926 = vpop.f32.mrf.mxu0
    %v927 = vadd.f32 %v821, %v926
    %v928 = vpop.f32.mrf.mxu0
    %v929 = vpop.f32.mrf.mxu0
    %v930 = vadd.f32 %v826, %v929
    %v931 = vpop.f32.mrf.mxu0
    %932 = vdwg.mxu0
    %v933 = vmax.f32 %v903, 0.0
    %v934 = vmax.f32 %v906, 0.0
    %v935 = vmax.f32 %v911, 0.0
    %v936 = vmax.f32 %v914, 0.0
    %v937 = vmax.f32 %v919, 0.0
    %v938 = vmax.f32 %v922, 0.0
    %v939 = vmax.f32 %v927, 0.0
    %v940 = vmax.f32 %v930, 0.0
    %v941 = vld [vmem:[%s5] sm:$0xff]
    %v942 = vld [vmem:[%s5 + $0x8] sm:$0xff]
    %v943 = vld [vmem:[%s5 + $0x10] sm:$0xff]
    %v944 = vld [vmem:[%s5 + $0x18] sm:$0xff]
    %v945 = vld [vmem:[%s5 + $0x20] sm:$0xff]
    %v946 = vld [vmem:[%s5 + $0x28] sm:$0xff]
    %v947 = vld [vmem:[%s5 + $0x30] sm:$0xff]
    %v948 = vld [vmem:[%s5 + $0x38] sm:$0xff]
    %950 = vset.pattern.permute.xlu0 0
    %951 = vperm.xlu0 %950, %v941
    %v952 = vpop.permute.xlu0 %951
    %955 = vset.pattern.permute.xlu0 0
    %956 = vperm.xlu0 %955, %v942
    %v957 = vpop.permute.xlu0 %956
    %960 = vset.pattern.permute.xlu0 0
    %961 = vperm.xlu0 %960, %v943
    %v962 = vpop.permute.xlu0 %961
    %965 = vset.pattern.permute.xlu0 0
    %966 = vperm.xlu0 %965, %v944
    %v967 = vpop.permute.xlu0 %966
    %970 = vset.pattern.permute.xlu0 0
    %971 = vperm.xlu0 %970, %v945
    %v972 = vpop.permute.xlu0 %971
    %975 = vset.pattern.permute.xlu0 0
    %976 = vperm.xlu0 %975, %v946
    %v977 = vpop.permute.xlu0 %976
    %980 = vset.pattern.permute.xlu0 0
    %981 = vperm.xlu0 %980, %v947
    %v982 = vpop.permute.xlu0 %981
    %985 = vset.pattern.permute.xlu0 0
    %986 = vperm.xlu0 %985, %v948
    %v987 = vpop.permute.xlu0 %986
    %v989 = vmul.f32 %v933, %v952
    %v990 = vmul.f32 %v934, %v957
    %v991 = vmul.f32 %v935, %v962
    %v992 = vmul.f32 %v936, %v967
    %v993 = vmul.f32 %v937, %v972
    %v994 = vmul.f32 %v938, %v977
    %v995 = vmul.f32 %v939, %v982
    %v996 = vmul.f32 %v940, %v987
    %v997 = vadd.f32 %v989, %v990
    %v998 = vadd.f32 %v997, %v991
    %v999 = vadd.f32 %v998, %v992
    %v1000 = vadd.f32 %v999, %v993
    %v1001 = vadd.f32 %v1000, %v994
    %v1002 = vadd.f32 %v1001, %v995
    %v1003 = vadd.f32 %v1002, %v996
    %v1004 = vrot.slane %v1003, 4
    %v1005 = vadd.f32 %v1003, %v1004
    %v1006 = vrot.slane %v1005, 2
    %v1007 = vadd.f32 %v1005, %v1006
    %v1008 = vrot.slane %v1007, 1
    %v1009 = vadd.f32 %v1007, %v1008
    %v1010 = vld [vmem:[#allocation2] sm:$0x1]
    %1012 = vset.pattern.permute.xlu0 0
    %1013 = vperm.xlu0 %1012, %v1010
    %v1014 = vpop.permute.xlu0 %1013
    %v1016 = vlaneseq
    %v1017 = vshrl.u32 %v1016, 7
    %v1018 = vsub.s32 0, %v1017
    %v1019 = vrot.slane %v1014, %v1018
    %v1020 = vadd.f32 %v1009, %v1019
    %1021 = vst [vmem:[#allocation3] sm:$0x1] %v1020
    // Predicated region
    $region30: #{tpu_custom_call.1} parent=1 // pred_check
      _
    $region31: #{tpu_custom_call.1} parent=1 // pred_check_branch
      %1023 = sbr.rel (0) target = $region33
    $region32: #{tpu_custom_call.1} parent=1 // pred_region
      %s1025 = ssub.s32 16, 16
      %1026 = vsyncadd [#allocation4], %s1025
      %s1028 = sshll.u32 [#allocation3], 4
      %s1029 = int_to_ptr.vmem [resolvable:$true] %s1028
      %1031 = dma.vmem_to_hbm [thread:$0]  %s1029, 16, %s7, [#allocation4]
    $region33: #{tpu_custom_call.1} parent=1 // pred_fallthru
      _
    // Predicated region
    $region34: #{tpu_custom_call.1} parent=1 // pred_check
      _
    $region35: #{tpu_custom_call.1} parent=1 // pred_check_branch
      %1033 = sbr.rel (0) target = $region37
    $region36: #{tpu_custom_call.1} parent=1 // pred_region
      %1034 = dma.done [#allocation4], 16
    $region37: #{tpu_custom_call.1} parent=1 // pred_fallthru
      _
    %1035 = vsyncpa [#allocation4], 1

</llo_original>
